<compile_context>
chip_gen: v7x
topology: tpu7x:2x2x1
jax: 0.10.0
libtpu: 0.0.40
codegen_flags: <defaults>
</compile_context>

<pallas_src>
import jax
import jax.numpy as jnp
from jax.experimental import pallas as pl
from jax.experimental.pallas import tpu as pltpu

_TB = 128  # images per grid step (one full lane tile)


def _conv_argmax_kernel(w_ref, x_ref, out_ref):
    # w_ref:   (4, 40, 128) f32 VMEM — row-shifted flattened 5x5 weights, broadcast
    #          over lanes; slab r holds w_flat at sublane offset 5*r, zeros elsewhere.
    # x_ref:   (40, 128)    f32 VMEM — 128 resized images; (row*5 + col) on sublanes,
    #          batch on lanes.
    # out_ref: (1, 128)     i32 VMEM — per-image argmax over the 4 conv outputs.
    x = x_ref[...]                                             # (40, 128)
    w = w_ref[...]                                             # (4, 40, 128)

    # Four sliding-window dot products, vectorized over the 128 images in the lanes.
    vals = [jnp.sum(x * w[r], axis=0, keepdims=True) for r in range(4)]  # 4 x (1,128)

    # Lane-vectorized argmax with first-occurrence tie-breaking (strict '>').
    best_val = vals[0]
    best_idx = jnp.zeros((1, _TB), dtype=jnp.int32)
    for r in range(1, 4):
        gt = vals[r] > best_val
        best_idx = jnp.where(gt, jnp.int32(r), best_idx)
        best_val = jnp.where(gt, vals[r], best_val)

    out_ref[...] = best_idx


@jax.jit
def kernel_forward(images, conv_weight):
    """Batched forward. images: (B, H, W) grayscale; conv_weight: (5, 5).

    Returns (B,) int32 argmax indices. B = 1 reproduces the PyTorch module exactly.
    """
    images = images.astype(jnp.float32)
    conv_weight = conv_weight.astype(jnp.float32)
    B = images.shape[0]
    n_blocks = pl.cdiv(B, _TB)
    B_pad = n_blocks * _TB

    # pre_process: cv2.resize(image, (5, 8)) -> 8 rows x 5 cols, per image.
    small = jax.vmap(
        lambda im: jax.image.resize(im, (8, 5), method="linear")
    )(images)                                                          # (B, 8, 5)

    # Batch-in-lanes layout: flatten (row, col) onto 40 sublanes, batch onto lanes.
    x = small.reshape(B, 40).T                                         # (40, B)
    x = jax.lax.pad(x, jnp.float32(0.0), ((0, 0, 0), (0, B_pad - B, 0)))  # (40, B_pad)

    # Pack the 4 row-shifted flattened weights and broadcast across the 128 lanes.
    # Window r needs weight value w[i, j] at flat index (r+i)*5 + j, i.e. the
    # flattened weight placed at sublane offset 5*r.  Zero padding is load-bearing.
    w_flat = conv_weight.reshape(25)
    w_pack = jnp.stack(
        [jnp.pad(w_flat, (5 * r, 15 - 5 * r)) for r in range(4)])      # (4, 40)
    w_pack = jnp.broadcast_to(w_pack[:, :, None], (4, 40, _TB))        # (4, 40, 128)

    out = pl.pallas_call(
        _conv_argmax_kernel,
        out_shape=jax.ShapeDtypeStruct((1, B_pad), jnp.int32),
        grid=(n_blocks,),
        in_specs=[
            pl.BlockSpec((4, 40, _TB), lambda b: (0, 0, 0)),   # weights, held resident
            pl.BlockSpec((40, _TB), lambda b: (0, b)),         # 128 images / step
        ],
        out_specs=pl.BlockSpec((1, _TB), lambda b: (0, b)),    # lane-dense i32 output
        compiler_params=pltpu.CompilerParams(
            dimension_semantics=("parallel",)),
    )(w_pack, x)
    return out[0, :B]


def _reference_forward(images, conv_weight):
    """Pure-JAX reference of the same forward pass (sanity check)."""
    conv_weight = conv_weight.astype(jnp.float32)

    def one(im):
        small = jax.image.resize(im.astype(jnp.float32), (8, 5), method="linear")
        vals = jnp.stack(
            [jnp.sum(small[r:r + 5, :] * conv_weight) for r in range(4)])
        return jnp.argmax(vals).astype(jnp.int32)

    return jax.vmap(one)(images)


if __name__ == "__main__":
    key = jax.random.PRNGKey(0)
    B = 2
    # Small synthetic grayscale "images" (what cv2.resize would consume).
    images = jax.random.uniform(key, (B, 16, 16), dtype=jnp.float32)
    # Deterministic parameter init, matching Kernel.__init__ default: ones(1,1,5,5).
    conv_weight = jnp.ones((5, 5), dtype=jnp.float32)

    out = jax.block_until_ready(kernel_forward(images, conv_weight))
    ref = jax.block_until_ready(_reference_forward(images, conv_weight))

    assert out.shape == (B,) and out.dtype == jnp.int32
    assert bool(jnp.all(out == ref)), f"mismatch: pallas={out} ref={ref}"

    print("KERNEL_OK")
</pallas_src>

<mosaic_0001>
module attributes {stable_mosaic.version = 11 : i64} {
  func.func @_conv_argmax_kernel(%arg0: i32, %arg1: memref<4x40x128xf32, #tpu.memory_space<vmem>>, %arg2: memref<40x128xf32, #tpu.memory_space<vmem>>, %arg3: memref<1x128xi32, #tpu.memory_space<vmem>>) attributes {dimension_semantics = [#tpu.dimension_semantics<parallel>], iteration_bounds = array<i64: 1>, scalar_prefetch = 0 : i64, scratch_operands = 0 : i64, tpu.core_type = #tpu.core_type<tc>, window_params = [{pipeline_mode = #tpu.pipeline_mode<synchronous>, transform_indices = @transform_0, window_bounds = array<i64: 4, 40, 128>}, {transform_indices = @transform_1, window_bounds = array<i64: 40, 128>}, {transform_indices = @transform_2, window_bounds = array<i64: 1, 128>}]} {
    %c0 = arith.constant 0 : index
    %c0_0 = arith.constant 0 : index
    %0 = vector.load %arg2[%c0, %c0_0] : memref<40x128xf32, #tpu.memory_space<vmem>>, vector<40x128xf32>
    %c0_1 = arith.constant 0 : index
    %c0_2 = arith.constant 0 : index
    %c0_3 = arith.constant 0 : index
    %1 = vector.load %arg1[%c0_1, %c0_2, %c0_3] : memref<4x40x128xf32, #tpu.memory_space<vmem>>, vector<4x40x128xf32>
    %2 = vector.extract_strided_slice %1 {offsets = [0, 0, 0], sizes = [1, 40, 128], strides = [1, 1, 1]} : vector<4x40x128xf32> to vector<1x40x128xf32>
    %3 = vector.shape_cast %2 : vector<1x40x128xf32> to vector<40x128xf32>
    %4 = arith.mulf %0, %3 : vector<40x128xf32>
    %cst = arith.constant dense<0.000000e+00> : vector<128xf32>
    %5 = vector.multi_reduction <add>, %4, %cst [0] : vector<40x128xf32> to vector<128xf32>
    %6 = vector.shape_cast %5 : vector<128xf32> to vector<1x128xf32>
    %7 = vector.extract_strided_slice %1 {offsets = [1, 0, 0], sizes = [1, 40, 128], strides = [1, 1, 1]} : vector<4x40x128xf32> to vector<1x40x128xf32>
    %8 = vector.shape_cast %7 : vector<1x40x128xf32> to vector<40x128xf32>
    %9 = arith.mulf %0, %8 : vector<40x128xf32>
    %cst_4 = arith.constant dense<0.000000e+00> : vector<128xf32>
    %10 = vector.multi_reduction <add>, %9, %cst_4 [0] : vector<40x128xf32> to vector<128xf32>
    %11 = vector.shape_cast %10 : vector<128xf32> to vector<1x128xf32>
    %12 = vector.extract_strided_slice %1 {offsets = [2, 0, 0], sizes = [1, 40, 128], strides = [1, 1, 1]} : vector<4x40x128xf32> to vector<1x40x128xf32>
    %13 = vector.shape_cast %12 : vector<1x40x128xf32> to vector<40x128xf32>
    %14 = arith.mulf %0, %13 : vector<40x128xf32>
    %cst_5 = arith.constant dense<0.000000e+00> : vector<128xf32>
    %15 = vector.multi_reduction <add>, %14, %cst_5 [0] : vector<40x128xf32> to vector<128xf32>
    %16 = vector.shape_cast %15 : vector<128xf32> to vector<1x128xf32>
    %17 = vector.extract_strided_slice %1 {offsets = [3, 0, 0], sizes = [1, 40, 128], strides = [1, 1, 1]} : vector<4x40x128xf32> to vector<1x40x128xf32>
    %18 = vector.shape_cast %17 : vector<1x40x128xf32> to vector<40x128xf32>
    %19 = arith.mulf %0, %18 : vector<40x128xf32>
    %cst_6 = arith.constant dense<0.000000e+00> : vector<128xf32>
    %20 = vector.multi_reduction <add>, %19, %cst_6 [0] : vector<40x128xf32> to vector<128xf32>
    %21 = vector.shape_cast %20 : vector<128xf32> to vector<1x128xf32>
    %c0_i32 = arith.constant 0 : i32
    %22 = vector.broadcast %c0_i32 : i32 to vector<1x128xi32>
    %23 = arith.cmpf ogt, %11, %6 : vector<1x128xf32>
    %c1_i32 = arith.constant 1 : i32
    %24 = vector.broadcast %c1_i32 : i32 to vector<1x128xi32>
    %25 = arith.select %23, %24, %22 : vector<1x128xi1>, vector<1x128xi32>
    %26 = arith.select %23, %11, %6 : vector<1x128xi1>, vector<1x128xf32>
    %27 = arith.cmpf ogt, %16, %26 : vector<1x128xf32>
    %c2_i32 = arith.constant 2 : i32
    %28 = vector.broadcast %c2_i32 : i32 to vector<1x128xi32>
    %29 = arith.select %27, %28, %25 : vector<1x128xi1>, vector<1x128xi32>
    %30 = arith.select %27, %16, %26 : vector<1x128xi1>, vector<1x128xf32>
    %31 = arith.cmpf ogt, %21, %30 : vector<1x128xf32>
    %c3_i32 = arith.constant 3 : i32
    %32 = vector.broadcast %c3_i32 : i32 to vector<1x128xi32>
    %33 = arith.select %31, %32, %29 : vector<1x128xi1>, vector<1x128xi32>
    %c0_7 = arith.constant 0 : index
    %c0_8 = arith.constant 0 : index
    %34 = vector.load %arg3[%c0_7, %c0_8] : memref<1x128xi32, #tpu.memory_space<vmem>>, vector<1x128xi32>
    tpu.vector_store %arg3[%c0_7, %c0_8], %33 {strides = array<i32>} : memref<1x128xi32, #tpu.memory_space<vmem>>, vector<1x128xi32>,
    return
  }
  func.func @transform_0(%arg0: i32) -> (i32, i32, i32) {
    %c0_i32 = arith.constant 0 : i32
    %c0_i32_0 = arith.constant 0 : i32
    %c0_i32_1 = arith.constant 0 : i32
    %c0_i32_2 = arith.constant 0 : i32
    return %c0_i32, %c0_i32_0, %c0_i32_1 : i32, i32, i32
  }
  func.func @transform_1(%arg0: i32) -> (i32, i32) {
    %c0_i32 = arith.constant 0 : i32
    %c0_i32_0 = arith.constant 0 : i32
    return %c0_i32, %arg0 : i32, i32
  }
  func.func @transform_2(%arg0: i32) -> (i32, i32) {
    %c0_i32 = arith.constant 0 : i32
    %c0_i32_0 = arith.constant 0 : i32
    return %c0_i32, %arg0 : i32, i32
  }
}

</mosaic_0001>

<llo_original>
// kernel: kernel_forward.1
$region0: #{kernel_forward.1}
  #allocation0 [shape = 'u32[]', space=smem, size = 0x4, offset = 0x4, fixed_abs, tag = 'smem constant byte address 0x4 - core index']
  #allocation1 [shape = 'u32[144,128]{1,0:T(1,128)}', space=vmem, size = 0x12000, scoped, tag = 'internal scratch']
  %s0 = inlined_call_operand.vmem [shape: f32[4,40,128], index: 0, kind: input, shape index: {}]
  %s1 = inlined_call_operand.vmem [shape: f32[40,128], index: 1, kind: input, shape index: {}]
  %s2 = inlined_call_operand.vmem [shape: s32[1,128], index: 2, kind: output, shape index: {}]
  %s3 = sld [smem:[#allocation0]]
  $region18: #{kernel_forward.1} parent=0
    _
  %s5 = ssub.s32 1, %s3
  %s6 = scalar_select 0, %s5, %s3
  // Predicated region
  $region2: #{kernel_forward.1} parent=0 // pred_check
    _
  $region3: #{kernel_forward.1} parent=0 // pred_check_branch
    %8 = sbr.rel (0) target = $region5
  $region4: #{kernel_forward.1} parent=0 // pred_region
    _
  $region5: #{kernel_forward.1} parent=0 // pred_fallthru
    _
  // Predicated region
  $region6: #{kernel_forward.1} parent=0 // pred_check
    _
  $region7: #{kernel_forward.1} parent=0 // pred_check_branch
    %10 = sbr.rel (0) target = $region9
  $region8: #{kernel_forward.1} parent=0 // pred_region
    _
  $region9: #{kernel_forward.1} parent=0 // pred_fallthru
    _
  %v11 = vld [vmem:[%s1] sm:$0xff]
  %v12 = vld [vmem:[%s1 + $0x8] sm:$0xff]
  %v13 = vld [vmem:[%s1 + $0x10] sm:$0xff]
  %v14 = vld [vmem:[%s1 + $0x18] sm:$0xff]
  %v15 = vld [vmem:[%s1 + $0x20] sm:$0xff]
  %v16 = vld [vmem:[%s0] sm:$0xff]
  %v17 = vld [vmem:[%s0 + $0x8] sm:$0xff]
  %v18 = vld [vmem:[%s0 + $0x10] sm:$0xff]
  %v19 = vld [vmem:[%s0 + $0x18] sm:$0xff]
  %v20 = vld [vmem:[%s0 + $0x20] sm:$0xff]
  %v21 = vld [vmem:[%s0 + $0x28] sm:$0xff]
  %v22 = vld [vmem:[%s0 + $0x30] sm:$0xff]
  %v23 = vld [vmem:[%s0 + $0x38] sm:$0xff]
  %v24 = vld [vmem:[%s0 + $0x40] sm:$0xff]
  %v25 = vld [vmem:[%s0 + $0x48] sm:$0xff]
  %v26 = vld [vmem:[%s0 + $0x50] sm:$0xff]
  %v27 = vld [vmem:[%s0 + $0x58] sm:$0xff]
  %v28 = vld [vmem:[%s0 + $0x60] sm:$0xff]
  %v29 = vld [vmem:[%s0 + $0x68] sm:$0xff]
  %v30 = vld [vmem:[%s0 + $0x70] sm:$0xff]
  %v31 = vld [vmem:[%s0 + $0x78] sm:$0xff]
  %v32 = vld [vmem:[%s0 + $0x80] sm:$0xff]
  %v33 = vld [vmem:[%s0 + $0x88] sm:$0xff]
  %v34 = vld [vmem:[%s0 + $0x90] sm:$0xff]
  %v35 = vld [vmem:[%s0 + $0x98] sm:$0xff]
  %v36 = vmul.f32 %v11, %v16
  %v37 = vmul.f32 %v12, %v17
  %v38 = vmul.f32 %v13, %v18
  %v39 = vmul.f32 %v14, %v19
  %v40 = vmul.f32 %v15, %v20
  %v41 = vadd.f32 %v36, %v37
  %v42 = vadd.f32 %v41, %v38
  %v43 = vadd.f32 %v42, %v39
  %v44 = vadd.f32 %v43, %v40
  %v45 = vrot.slane %v44, 4
  %v46 = vadd.f32 %v44, %v45
  %v47 = vrot.slane %v46, 2
  %v48 = vadd.f32 %v46, %v47
  %v49 = vrot.slane %v48, 1
  %v50 = vadd.f32 %v48, %v49
  %v51 = vmul.f32 %v11, %v21
  %v52 = vmul.f32 %v12, %v22
  %v53 = vmul.f32 %v13, %v23
  %v54 = vmul.f32 %v14, %v24
  %v55 = vmul.f32 %v15, %v25
  %v56 = vadd.f32 %v51, %v52
  %v57 = vadd.f32 %v56, %v53
  %v58 = vadd.f32 %v57, %v54
  %v59 = vadd.f32 %v58, %v55
  %v60 = vrot.slane %v59, 4
  %v61 = vadd.f32 %v59, %v60
  %v62 = vrot.slane %v61, 2
  %v63 = vadd.f32 %v61, %v62
  %v64 = vrot.slane %v63, 1
  %v65 = vadd.f32 %v63, %v64
  %v66 = vmul.f32 %v11, %v26
  %v67 = vmul.f32 %v12, %v27
  %v68 = vmul.f32 %v13, %v28
  %v69 = vmul.f32 %v14, %v29
  %v70 = vmul.f32 %v15, %v30
  %v71 = vadd.f32 %v66, %v67
  %v72 = vadd.f32 %v71, %v68
  %v73 = vadd.f32 %v72, %v69
  %v74 = vadd.f32 %v73, %v70
  %v75 = vrot.slane %v74, 4
  %v76 = vadd.f32 %v74, %v75
  %v77 = vrot.slane %v76, 2
  %v78 = vadd.f32 %v76, %v77
  %v79 = vrot.slane %v78, 1
  %v80 = vadd.f32 %v78, %v79
  %v81 = vmul.f32 %v11, %v31
  %v82 = vmul.f32 %v12, %v32
  %v83 = vmul.f32 %v13, %v33
  %v84 = vmul.f32 %v14, %v34
  %v85 = vmul.f32 %v15, %v35
  %v86 = vadd.f32 %v81, %v82
  %v87 = vadd.f32 %v86, %v83
  %v88 = vadd.f32 %v87, %v84
  %v89 = vadd.f32 %v88, %v85
  %v90 = vrot.slane %v89, 4
  %v91 = vadd.f32 %v89, %v90
  %v92 = vrot.slane %v91, 2
  %v93 = vadd.f32 %v91, %v92
  %v94 = vrot.slane %v93, 1
  %v95 = vadd.f32 %v93, %v94
  %vm96 = vcmp.gt.f32.partialorder %v65, %v50
  %v97 = vsel %vm96, 1, 0
  %v98 = vsel %vm96, %v65, %v50
  %vm99 = vcmp.gt.f32.partialorder %v80, %v98
  %v100 = vsel %vm99, 2, %v97
  %v101 = vsel %vm99, %v80, %v98
  %vm102 = vcmp.gt.f32.partialorder %v95, %v101
  %v103 = vsel %vm102, 3, %v100
  %104 = vst [vmem:[%s2] sm:$0x1] %v103
  // Predicated region
  $region10: #{kernel_forward.1} parent=0 // pred_check
    _
  $region11: #{kernel_forward.1} parent=0 // pred_check_branch
    %106 = sbr.rel (0) target = $region13
  $region12: #{kernel_forward.1} parent=0 // pred_region
    _
  $region13: #{kernel_forward.1} parent=0 // pred_fallthru
    _
  // Predicated region
  $region14: #{kernel_forward.1} parent=0 // pred_check
    _
  $region15: #{kernel_forward.1} parent=0 // pred_check_branch
    %108 = sbr.rel (0) target = $region17
  $region16: #{kernel_forward.1} parent=0 // pred_region
    _
  $region17: #{kernel_forward.1} parent=0 // pred_fallthru
    _

</llo_original>
